<compile_context>
chip_gen: v5e
topology: v5e:2x2
jax: 0.10.0
libtpu: 0.0.40
codegen_flags: <defaults>
</compile_context>

<pallas_src>
import functools

import jax
import jax.numpy as jnp
from jax.experimental import pallas as pl
from jax.experimental.pallas import tpu as pltpu

_LANE = 128


def _mlp_kernel(x_ref, p_ref, o_ref, *, in_f, hid, out_f):
    # x_ref: (block_b, in_f)  native batch-major tile
    # p_ref: (rows, in_f + 2*hid + 3) packed [w1T | w2T | w3T | b1 | b2 | b3]
    # o_ref: (block_b, out_f) native batch-major tile
    x = x_ref[...].astype(jnp.float32)
    bb = x.shape[0]
    p = p_ref[...]

    c = 0
    w1 = p[:hid, c:c + in_f]; c += in_f          # (hid, in_f)
    w2 = p[:hid, c:c + hid]; c += hid            # (hid, hid)
    w3 = p[:out_f, c:c + hid]; c += hid          # (out_f, hid)
    b1 = p[:hid, c:c + 1]                        # (hid, 1)
    b2 = p[:hid, c + 1:c + 2]
    b3 = p[:out_f, c + 2:c + 3]

    # Lane-dense compute layout: batch sits on the 128-lane axis.  The small
    # transpose runs on the XLU/vex slot, which is idle here (DMA-bound kernel).
    xT = x.T                                     # (in_f, bb)

    def layer(w, b, a):
        # y (n, bb) = w (n, k) @ a (k, bb) + b (n, 1), unrolled on the VPU.
        # K is 4 or 8 -> fully unrolled; MXU would have to stream block_b
        # through 8-row vmatmuls and would be slower for these tiny K/N.
        n, k = w.shape
        acc = jnp.broadcast_to(b, (n, bb))
        for j in range(k):
            acc = acc + w[:, j:j + 1] * a[j:j + 1, :]
        return acc

    h1 = jnp.maximum(layer(w1, b1, xT), 0.0)
    h2 = jnp.maximum(layer(w2, b2, h1), 0.0)
    yT = layer(w3, b3, h2)                       # (out_f, bb)
    o_ref[...] = yT.T.astype(o_ref.dtype)        # back to (bb, out_f)


def _pick_block_b(B, requested):
    """Batch-tile rows: multiple of 128 (or full B for small B), >=2 tiles when
    B > 256 so v7x's two TensorCores both get work, capped at 8192 rows so the
    lane-padded (block_b, 128) VMEM buffers stay well under the scoped limit."""
    req = max(_LANE, min(int(requested), 8192))
    req = (req // _LANE) * _LANE
    if B <= 2 * _LANE:
        return B                                  # single full-extent block
    n_steps = max(pl.cdiv(B, req), 2)             # >=2 grid steps (megacore)
    bb = pl.cdiv(B, n_steps)
    return ((bb + _LANE - 1) // _LANE) * _LANE


def _pack_params(params, in_f, hid, out_f):
    """Pack all weights/biases (transposed to (out, in)) into one tiny f32 array."""
    rows = max(hid, out_f)
    cols = in_f + 2 * hid + 3
    w1T = params["w1"].T.astype(jnp.float32)      # (hid, in_f)
    w2T = params["w2"].T.astype(jnp.float32)      # (hid, hid)
    w3T = params["w3"].T.astype(jnp.float32)      # (out_f, hid)
    b1 = params["b1"].reshape(-1).astype(jnp.float32)
    b2 = params["b2"].reshape(-1).astype(jnp.float32)
    b3 = params["b3"].reshape(-1).astype(jnp.float32)
    p = jnp.zeros((rows, cols), jnp.float32)
    c = 0
    p = p.at[:hid, c:c + in_f].set(w1T); c += in_f
    p = p.at[:hid, c:c + hid].set(w2T); c += hid
    p = p.at[:out_f, c:c + hid].set(w3T); c += hid
    p = p.at[:hid, c].set(b1)
    p = p.at[:hid, c + 1].set(b2)
    p = p.at[:out_f, c + 2].set(b3)
    return p


@functools.partial(jax.jit, static_argnames=("block_b",))
def multiclass_forward(x, params, block_b=4096):
    """x: (B, input_features). params: dict of w1,b1,w2,b2,w3,b3 (w stored (in, out))."""
    B, in_f = x.shape
    hid = params["w1"].shape[1]
    out_f = params["w3"].shape[1]

    packed = _pack_params(params, in_f, hid, out_f)

    bb = _pick_block_b(B, block_b)
    n_steps = pl.cdiv(B, bb)
    B_pad = n_steps * bb
    # Common case (B divisible by the chosen tile, incl. any B <= 256): no pad,
    # no slice -> the kernel is the only pass over x / out.
    x_in = x if B_pad == B else jnp.pad(x, ((0, B_pad - B), (0, 0)))

    kernel = functools.partial(_mlp_kernel, in_f=in_f, hid=hid, out_f=out_f)

    out = pl.pallas_call(
        kernel,
        out_shape=jax.ShapeDtypeStruct((B_pad, out_f), x.dtype),
        grid_spec=pltpu.PrefetchScalarGridSpec(
            num_scalar_prefetch=0,
            grid=(n_steps,),
            in_specs=[
                pl.BlockSpec((bb, in_f), lambda i: (i, 0)),      # native x tile
                pl.BlockSpec(packed.shape, lambda i: (0, 0)),    # resident params
            ],
            out_specs=pl.BlockSpec((bb, out_f), lambda i: (i, 0)),
        ),
        compiler_params=pltpu.CompilerParams(
            dimension_semantics=("parallel",),   # batch tiles shard across TCs (v7x)
            vmem_limit_bytes=32 * 1024 * 1024,   # headroom over v5e's 16 MiB default
        ),
    )(x_in, packed)

    return out if B_pad == B else out[:B]


def init_params(key, input_features, output_features, hidden_units=8):
    """Deterministic init mimicking nn.Linear (uniform +-1/sqrt(fan_in)); w stored (in, out)."""
    ks = jax.random.split(key, 6)

    def linear(kw, kb, fan_in, fan_out):
        bound = 1.0 / jnp.sqrt(fan_in)
        w = jax.random.uniform(kw, (fan_in, fan_out), jnp.float32, -bound, bound)
        b = jax.random.uniform(kb, (1, fan_out), jnp.float32, -bound, bound)
        return w, b

    w1, b1 = linear(ks[0], ks[1], input_features, hidden_units)
    w2, b2 = linear(ks[2], ks[3], hidden_units, hidden_units)
    w3, b3 = linear(ks[4], ks[5], hidden_units, output_features)
    return {"w1": w1, "b1": b1, "w2": w2, "b2": b2, "w3": w3, "b3": b3}


def _ref_forward(x, p):
    h1 = jnp.maximum(x @ p["w1"] + p["b1"], 0.0)
    h2 = jnp.maximum(h1 @ p["w2"] + p["b2"], 0.0)
    return h2 @ p["w3"] + p["b3"]


if __name__ == "__main__":
    key = jax.random.PRNGKey(0)
    k_param, k_x1, k_x2 = jax.random.split(key, 3)

    input_features, output_features, hidden_units = 4, 3, 8
    params = init_params(k_param, input_features, output_features, hidden_units)

    # Small batch: single full-extent tile, no padding, no wrapper passes.
    x_small = jax.random.normal(k_x1, (16, input_features), dtype=jnp.float32)
    out_small = jax.block_until_ready(multiclass_forward(x_small, params))
    ref_small = _ref_forward(x_small, params)
    assert out_small.shape == (16, output_features)
    assert jnp.allclose(out_small, ref_small, atol=1e-5, rtol=1e-5), "mismatch (small batch)"

    # Non-divisible batch: exercises the multi-step grid (2 tiles -> megacore)
    # and the rare padding fallback.
    x_big = jax.random.normal(k_x2, (300, input_features), dtype=jnp.float32)
    out_big = jax.block_until_ready(multiclass_forward(x_big, params))
    ref_big = _ref_forward(x_big, params)
    assert out_big.shape == (300, output_features)
    assert jnp.allclose(out_big, ref_big, atol=1e-5, rtol=1e-5), "mismatch (multi-tile batch)"

    print("KERNEL_OK")
</pallas_src>

<mosaic_0001>
module attributes {stable_mosaic.version = 11 : i64} {
  func.func @_mlp_kernel(%arg0: i32, %arg1: memref<16x4xf32, #tpu.memory_space<vmem>>, %arg2: memref<8x23xf32, #tpu.memory_space<vmem>>, %arg3: memref<16x3xf32, #tpu.memory_space<vmem>>) attributes {dimension_semantics = [#tpu.dimension_semantics<parallel>], iteration_bounds = array<i64: 1>, scalar_prefetch = 0 : i64, scratch_operands = 0 : i64, tpu.core_type = #tpu.core_type<tc>, window_params = [{transform_indices = @transform_0, window_bounds = array<i64: 16, 4>}, {pipeline_mode = #tpu.pipeline_mode<synchronous>, transform_indices = @transform_1, window_bounds = array<i64: 8, 23>}, {transform_indices = @transform_2, window_bounds = array<i64: 16, 3>}]} {
    %c0 = arith.constant 0 : index
    %c0_0 = arith.constant 0 : index
    %0 = vector.load %arg1[%c0, %c0_0] : memref<16x4xf32, #tpu.memory_space<vmem>>, vector<16x4xf32>
    %c0_1 = arith.constant 0 : index
    %c0_2 = arith.constant 0 : index
    %1 = vector.load %arg2[%c0_1, %c0_2] : memref<8x23xf32, #tpu.memory_space<vmem>>, vector<8x23xf32>
    %2 = vector.extract_strided_slice %1 {offsets = [0, 0], sizes = [8, 4], strides = [1, 1]} : vector<8x23xf32> to vector<8x4xf32>
    %3 = vector.extract_strided_slice %1 {offsets = [0, 4], sizes = [8, 8], strides = [1, 1]} : vector<8x23xf32> to vector<8x8xf32>
    %4 = vector.extract_strided_slice %1 {offsets = [0, 12], sizes = [3, 8], strides = [1, 1]} : vector<8x23xf32> to vector<3x8xf32>
    %5 = vector.extract_strided_slice %1 {offsets = [0, 20], sizes = [8, 1], strides = [1, 1]} : vector<8x23xf32> to vector<8x1xf32>
    %6 = vector.extract_strided_slice %1 {offsets = [0, 21], sizes = [8, 1], strides = [1, 1]} : vector<8x23xf32> to vector<8x1xf32>
    %7 = vector.extract_strided_slice %1 {offsets = [0, 22], sizes = [3, 1], strides = [1, 1]} : vector<8x23xf32> to vector<3x1xf32>
    %8 = tpu.transpose %0, [1, 0] : vector<16x4xf32> -> vector<4x16xf32>
    %9 = vector.shape_cast %5 : vector<8x1xf32> to vector<8x1xf32>
    %10 = vector.broadcast %9 : vector<8x1xf32> to vector<8x16xf32>
    %11 = vector.extract_strided_slice %2 {offsets = [0, 0], sizes = [8, 1], strides = [1, 1]} : vector<8x4xf32> to vector<8x1xf32>
    %12 = vector.extract_strided_slice %8 {offsets = [0, 0], sizes = [1, 16], strides = [1, 1]} : vector<4x16xf32> to vector<1x16xf32>
    %13 = vector.broadcast %11 : vector<8x1xf32> to vector<8x16xf32>
    %14 = vector.broadcast %12 : vector<1x16xf32> to vector<8x16xf32>
    %15 = arith.mulf %13, %14 : vector<8x16xf32>
    %16 = arith.addf %10, %15 : vector<8x16xf32>
    %17 = vector.extract_strided_slice %2 {offsets = [0, 1], sizes = [8, 1], strides = [1, 1]} : vector<8x4xf32> to vector<8x1xf32>
    %18 = vector.extract_strided_slice %8 {offsets = [1, 0], sizes = [1, 16], strides = [1, 1]} : vector<4x16xf32> to vector<1x16xf32>
    %19 = vector.broadcast %17 : vector<8x1xf32> to vector<8x16xf32>
    %20 = vector.broadcast %18 : vector<1x16xf32> to vector<8x16xf32>
    %21 = arith.mulf %19, %20 : vector<8x16xf32>
    %22 = arith.addf %16, %21 : vector<8x16xf32>
    %23 = vector.extract_strided_slice %2 {offsets = [0, 2], sizes = [8, 1], strides = [1, 1]} : vector<8x4xf32> to vector<8x1xf32>
    %24 = vector.extract_strided_slice %8 {offsets = [2, 0], sizes = [1, 16], strides = [1, 1]} : vector<4x16xf32> to vector<1x16xf32>
    %25 = vector.broadcast %23 : vector<8x1xf32> to vector<8x16xf32>
    %26 = vector.broadcast %24 : vector<1x16xf32> to vector<8x16xf32>
    %27 = arith.mulf %25, %26 : vector<8x16xf32>
    %28 = arith.addf %22, %27 : vector<8x16xf32>
    %29 = vector.extract_strided_slice %2 {offsets = [0, 3], sizes = [8, 1], strides = [1, 1]} : vector<8x4xf32> to vector<8x1xf32>
    %30 = vector.extract_strided_slice %8 {offsets = [3, 0], sizes = [1, 16], strides = [1, 1]} : vector<4x16xf32> to vector<1x16xf32>
    %31 = vector.broadcast %29 : vector<8x1xf32> to vector<8x16xf32>
    %32 = vector.broadcast %30 : vector<1x16xf32> to vector<8x16xf32>
    %33 = arith.mulf %31, %32 : vector<8x16xf32>
    %34 = arith.addf %28, %33 : vector<8x16xf32>
    %cst = arith.constant 0.000000e+00 : f32
    %35 = vector.broadcast %cst : f32 to vector<8x16xf32>
    %36 = arith.maximumf %34, %35 : vector<8x16xf32>
    %37 = vector.shape_cast %6 : vector<8x1xf32> to vector<8x1xf32>
    %38 = vector.broadcast %37 : vector<8x1xf32> to vector<8x16xf32>
    %39 = vector.extract_strided_slice %3 {offsets = [0, 0], sizes = [8, 1], strides = [1, 1]} : vector<8x8xf32> to vector<8x1xf32>
    %40 = vector.extract_strided_slice %36 {offsets = [0, 0], sizes = [1, 16], strides = [1, 1]} : vector<8x16xf32> to vector<1x16xf32>
    %41 = vector.broadcast %39 : vector<8x1xf32> to vector<8x16xf32>
    %42 = vector.broadcast %40 : vector<1x16xf32> to vector<8x16xf32>
    %43 = arith.mulf %41, %42 : vector<8x16xf32>
    %44 = arith.addf %38, %43 : vector<8x16xf32>
    %45 = vector.extract_strided_slice %3 {offsets = [0, 1], sizes = [8, 1], strides = [1, 1]} : vector<8x8xf32> to vector<8x1xf32>
    %46 = vector.extract_strided_slice %36 {offsets = [1, 0], sizes = [1, 16], strides = [1, 1]} : vector<8x16xf32> to vector<1x16xf32>
    %47 = vector.broadcast %45 : vector<8x1xf32> to vector<8x16xf32>
    %48 = vector.broadcast %46 : vector<1x16xf32> to vector<8x16xf32>
    %49 = arith.mulf %47, %48 : vector<8x16xf32>
    %50 = arith.addf %44, %49 : vector<8x16xf32>
    %51 = vector.extract_strided_slice %3 {offsets = [0, 2], sizes = [8, 1], strides = [1, 1]} : vector<8x8xf32> to vector<8x1xf32>
    %52 = vector.extract_strided_slice %36 {offsets = [2, 0], sizes = [1, 16], strides = [1, 1]} : vector<8x16xf32> to vector<1x16xf32>
    %53 = vector.broadcast %51 : vector<8x1xf32> to vector<8x16xf32>
    %54 = vector.broadcast %52 : vector<1x16xf32> to vector<8x16xf32>
    %55 = arith.mulf %53, %54 : vector<8x16xf32>
    %56 = arith.addf %50, %55 : vector<8x16xf32>
    %57 = vector.extract_strided_slice %3 {offsets = [0, 3], sizes = [8, 1], strides = [1, 1]} : vector<8x8xf32> to vector<8x1xf32>
    %58 = vector.extract_strided_slice %36 {offsets = [3, 0], sizes = [1, 16], strides = [1, 1]} : vector<8x16xf32> to vector<1x16xf32>
    %59 = vector.broadcast %57 : vector<8x1xf32> to vector<8x16xf32>
    %60 = vector.broadcast %58 : vector<1x16xf32> to vector<8x16xf32>
    %61 = arith.mulf %59, %60 : vector<8x16xf32>
    %62 = arith.addf %56, %61 : vector<8x16xf32>
    %63 = vector.extract_strided_slice %3 {offsets = [0, 4], sizes = [8, 1], strides = [1, 1]} : vector<8x8xf32> to vector<8x1xf32>
    %64 = vector.extract_strided_slice %36 {offsets = [4, 0], sizes = [1, 16], strides = [1, 1]} : vector<8x16xf32> to vector<1x16xf32>
    %65 = vector.broadcast %63 : vector<8x1xf32> to vector<8x16xf32>
    %66 = vector.broadcast %64 : vector<1x16xf32> to vector<8x16xf32>
    %67 = arith.mulf %65, %66 : vector<8x16xf32>
    %68 = arith.addf %62, %67 : vector<8x16xf32>
    %69 = vector.extract_strided_slice %3 {offsets = [0, 5], sizes = [8, 1], strides = [1, 1]} : vector<8x8xf32> to vector<8x1xf32>
    %70 = vector.extract_strided_slice %36 {offsets = [5, 0], sizes = [1, 16], strides = [1, 1]} : vector<8x16xf32> to vector<1x16xf32>
    %71 = vector.broadcast %69 : vector<8x1xf32> to vector<8x16xf32>
    %72 = vector.broadcast %70 : vector<1x16xf32> to vector<8x16xf32>
    %73 = arith.mulf %71, %72 : vector<8x16xf32>
    %74 = arith.addf %68, %73 : vector<8x16xf32>
    %75 = vector.extract_strided_slice %3 {offsets = [0, 6], sizes = [8, 1], strides = [1, 1]} : vector<8x8xf32> to vector<8x1xf32>
    %76 = vector.extract_strided_slice %36 {offsets = [6, 0], sizes = [1, 16], strides = [1, 1]} : vector<8x16xf32> to vector<1x16xf32>
    %77 = vector.broadcast %75 : vector<8x1xf32> to vector<8x16xf32>
    %78 = vector.broadcast %76 : vector<1x16xf32> to vector<8x16xf32>
    %79 = arith.mulf %77, %78 : vector<8x16xf32>
    %80 = arith.addf %74, %79 : vector<8x16xf32>
    %81 = vector.extract_strided_slice %3 {offsets = [0, 7], sizes = [8, 1], strides = [1, 1]} : vector<8x8xf32> to vector<8x1xf32>
    %82 = vector.extract_strided_slice %36 {offsets = [7, 0], sizes = [1, 16], strides = [1, 1]} : vector<8x16xf32> to vector<1x16xf32>
    %83 = vector.broadcast %81 : vector<8x1xf32> to vector<8x16xf32>
    %84 = vector.broadcast %82 : vector<1x16xf32> to vector<8x16xf32>
    %85 = arith.mulf %83, %84 : vector<8x16xf32>
    %86 = arith.addf %80, %85 : vector<8x16xf32>
    %cst_3 = arith.constant 0.000000e+00 : f32
    %87 = vector.broadcast %cst_3 : f32 to vector<8x16xf32>
    %88 = arith.maximumf %86, %87 : vector<8x16xf32>
    %89 = vector.shape_cast %7 : vector<3x1xf32> to vector<3x1xf32>
    %90 = vector.broadcast %89 : vector<3x1xf32> to vector<3x16xf32>
    %91 = vector.extract_strided_slice %4 {offsets = [0, 0], sizes = [3, 1], strides = [1, 1]} : vector<3x8xf32> to vector<3x1xf32>
    %92 = vector.extract_strided_slice %88 {offsets = [0, 0], sizes = [1, 16], strides = [1, 1]} : vector<8x16xf32> to vector<1x16xf32>
    %93 = vector.broadcast %91 : vector<3x1xf32> to vector<3x16xf32>
    %94 = vector.broadcast %92 : vector<1x16xf32> to vector<3x16xf32>
    %95 = arith.mulf %93, %94 : vector<3x16xf32>
    %96 = arith.addf %90, %95 : vector<3x16xf32>
    %97 = vector.extract_strided_slice %4 {offsets = [0, 1], sizes = [3, 1], strides = [1, 1]} : vector<3x8xf32> to vector<3x1xf32>
    %98 = vector.extract_strided_slice %88 {offsets = [1, 0], sizes = [1, 16], strides = [1, 1]} : vector<8x16xf32> to vector<1x16xf32>
    %99 = vector.broadcast %97 : vector<3x1xf32> to vector<3x16xf32>
    %100 = vector.broadcast %98 : vector<1x16xf32> to vector<3x16xf32>
    %101 = arith.mulf %99, %100 : vector<3x16xf32>
    %102 = arith.addf %96, %101 : vector<3x16xf32>
    %103 = vector.extract_strided_slice %4 {offsets = [0, 2], sizes = [3, 1], strides = [1, 1]} : vector<3x8xf32> to vector<3x1xf32>
    %104 = vector.extract_strided_slice %88 {offsets = [2, 0], sizes = [1, 16], strides = [1, 1]} : vector<8x16xf32> to vector<1x16xf32>
    %105 = vector.broadcast %103 : vector<3x1xf32> to vector<3x16xf32>
    %106 = vector.broadcast %104 : vector<1x16xf32> to vector<3x16xf32>
    %107 = arith.mulf %105, %106 : vector<3x16xf32>
    %108 = arith.addf %102, %107 : vector<3x16xf32>
    %109 = vector.extract_strided_slice %4 {offsets = [0, 3], sizes = [3, 1], strides = [1, 1]} : vector<3x8xf32> to vector<3x1xf32>
    %110 = vector.extract_strided_slice %88 {offsets = [3, 0], sizes = [1, 16], strides = [1, 1]} : vector<8x16xf32> to vector<1x16xf32>
    %111 = vector.broadcast %109 : vector<3x1xf32> to vector<3x16xf32>
    %112 = vector.broadcast %110 : vector<1x16xf32> to vector<3x16xf32>
    %113 = arith.mulf %111, %112 : vector<3x16xf32>
    %114 = arith.addf %108, %113 : vector<3x16xf32>
    %115 = vector.extract_strided_slice %4 {offsets = [0, 4], sizes = [3, 1], strides = [1, 1]} : vector<3x8xf32> to vector<3x1xf32>
    %116 = vector.extract_strided_slice %88 {offsets = [4, 0], sizes = [1, 16], strides = [1, 1]} : vector<8x16xf32> to vector<1x16xf32>
    %117 = vector.broadcast %115 : vector<3x1xf32> to vector<3x16xf32>
    %118 = vector.broadcast %116 : vector<1x16xf32> to vector<3x16xf32>
    %119 = arith.mulf %117, %118 : vector<3x16xf32>
    %120 = arith.addf %114, %119 : vector<3x16xf32>
    %121 = vector.extract_strided_slice %4 {offsets = [0, 5], sizes = [3, 1], strides = [1, 1]} : vector<3x8xf32> to vector<3x1xf32>
    %122 = vector.extract_strided_slice %88 {offsets = [5, 0], sizes = [1, 16], strides = [1, 1]} : vector<8x16xf32> to vector<1x16xf32>
    %123 = vector.broadcast %121 : vector<3x1xf32> to vector<3x16xf32>
    %124 = vector.broadcast %122 : vector<1x16xf32> to vector<3x16xf32>
    %125 = arith.mulf %123, %124 : vector<3x16xf32>
    %126 = arith.addf %120, %125 : vector<3x16xf32>
    %127 = vector.extract_strided_slice %4 {offsets = [0, 6], sizes = [3, 1], strides = [1, 1]} : vector<3x8xf32> to vector<3x1xf32>
    %128 = vector.extract_strided_slice %88 {offsets = [6, 0], sizes = [1, 16], strides = [1, 1]} : vector<8x16xf32> to vector<1x16xf32>
    %129 = vector.broadcast %127 : vector<3x1xf32> to vector<3x16xf32>
    %130 = vector.broadcast %128 : vector<1x16xf32> to vector<3x16xf32>
    %131 = arith.mulf %129, %130 : vector<3x16xf32>
    %132 = arith.addf %126, %131 : vector<3x16xf32>
    %133 = vector.extract_strided_slice %4 {offsets = [0, 7], sizes = [3, 1], strides = [1, 1]} : vector<3x8xf32> to vector<3x1xf32>
    %134 = vector.extract_strided_slice %88 {offsets = [7, 0], sizes = [1, 16], strides = [1, 1]} : vector<8x16xf32> to vector<1x16xf32>
    %135 = vector.broadcast %133 : vector<3x1xf32> to vector<3x16xf32>
    %136 = vector.broadcast %134 : vector<1x16xf32> to vector<3x16xf32>
    %137 = arith.mulf %135, %136 : vector<3x16xf32>
    %138 = arith.addf %132, %137 : vector<3x16xf32>
    %139 = tpu.transpose %138, [1, 0] : vector<3x16xf32> -> vector<16x3xf32>
    %c0_4 = arith.constant 0 : index
    %c0_5 = arith.constant 0 : index
    %140 = vector.load %arg3[%c0_4, %c0_5] : memref<16x3xf32, #tpu.memory_space<vmem>>, vector<16x3xf32>
    tpu.vector_store %arg3[%c0_4, %c0_5], %139 {strides = array<i32>} : memref<16x3xf32, #tpu.memory_space<vmem>>, vector<16x3xf32>,
    return
  }
  func.func @transform_0(%arg0: i32) -> (i32, i32) {
    %c0_i32 = arith.constant 0 : i32
    %c0_i32_0 = arith.constant 0 : i32
    return %arg0, %c0_i32 : i32, i32
  }
  func.func @transform_1(%arg0: i32) -> (i32, i32) {
    %c0_i32 = arith.constant 0 : i32
    %c0_i32_0 = arith.constant 0 : i32
    %c0_i32_1 = arith.constant 0 : i32
    return %c0_i32, %c0_i32_0 : i32, i32
  }
  func.func @transform_2(%arg0: i32) -> (i32, i32) {
    %c0_i32 = arith.constant 0 : i32
    %c0_i32_0 = arith.constant 0 : i32
    return %arg0, %c0_i32 : i32, i32
  }
}

</mosaic_0001>

<llo_original>
// kernel: multiclass_forward.1
$region0: #{multiclass_forward.1}
  #allocation0 [shape = 'u32[]', space=smem, size = 0x4, offset = 0x4, fixed_abs, tag = 'smem constant byte address 0x4 - core index']
  #allocation1 [shape = 'u32[72,128]{1,0:T(1,128)}', space=vmem, size = 0x9000, scoped, tag = 'internal scratch']
  %s0 = inlined_call_operand.vmem [shape: f32[16,4], index: 0, kind: input, shape index: {}]
  %s1 = inlined_call_operand.vmem [shape: f32[8,23], index: 1, kind: input, shape index: {}]
  %s2 = inlined_call_operand.vmem [shape: f32[16,3], index: 2, kind: output, shape index: {}]
  %s3 = sld [smem:[#allocation0]]
  $region18: #{multiclass_forward.1} parent=0
    _
  %s5 = ssub.s32 1, %s3
  %s6 = scalar_select 0, %s5, %s3
  // Predicated region
  $region2: #{multiclass_forward.1} parent=0 // pred_check
    _
  $region3: #{multiclass_forward.1} parent=0 // pred_check_branch
    %8 = sbr.rel (0) target = $region5
  $region4: #{multiclass_forward.1} parent=0 // pred_region
    _
  $region5: #{multiclass_forward.1} parent=0 // pred_fallthru
    _
  // Predicated region
  $region6: #{multiclass_forward.1} parent=0 // pred_check
    _
  $region7: #{multiclass_forward.1} parent=0 // pred_check_branch
    %10 = sbr.rel (0) target = $region9
  $region8: #{multiclass_forward.1} parent=0 // pred_region
    _
  $region9: #{multiclass_forward.1} parent=0 // pred_fallthru
    _
  %v11 = vld [vmem:[%s0] sm:$0xff]
  %v12 = vld [vmem:[%s0 + $0x8] sm:$0xff]
  %v13 = vld [vmem:[%s1] sm:$0xff]
  %14 = vxpose.xlu0.b32.start [1/16] %v11, 128
  %15 = vxpose.xlu0.b32.cont [2/16] %v12, 128
  %16 = vxpose.xlu0.b32.cont [3/16] 0.0, 128
  %17 = vxpose.xlu0.b32.cont [4/16] 0.0, 128
  %18 = vxpose.xlu0.b32.cont [5/16] 0.0, 128
  %19 = vxpose.xlu0.b32.cont [6/16] 0.0, 128
  %20 = vxpose.xlu0.b32.cont [7/16] 0.0, 128
  %21 = vxpose.xlu0.b32.cont [8/16] 0.0, 128
  %22 = vxpose.xlu0.b32.cont [9/16] 0.0, 128
  %23 = vxpose.xlu0.b32.cont [10/16] 0.0, 128
  %24 = vxpose.xlu0.b32.cont [11/16] 0.0, 128
  %25 = vxpose.xlu0.b32.cont [12/16] 0.0, 128
  %26 = vxpose.xlu0.b32.cont [13/16] 0.0, 128
  %27 = vxpose.xlu0.b32.cont [14/16] 0.0, 128
  %28 = vxpose.xlu0.b32.cont [15/16] 0.0, 128
  %29 = vxpose.xlu0.b32.end [16/16] 0.0, 128
  %v30 = vpop.trf.xlu0
  %v31 = vpop.trf.xlu0
  %v32 = vpop.trf.xlu0
  %v33 = vpop.trf.xlu0
  %v34 = vpop.trf.xlu0
  %v35 = vpop.trf.xlu0
  %v36 = vpop.trf.xlu0
  %v37 = vpop.trf.xlu0
  %v38 = vpop.trf.xlu0
  %v39 = vpop.trf.xlu0
  %v40 = vpop.trf.xlu0
  %v41 = vpop.trf.xlu0
  %v42 = vpop.trf.xlu0
  %v43 = vpop.trf.xlu0
  %v44 = vpop.trf.xlu0
  %v45 = vpop.trf.xlu0
  %47 = vset.pattern.permute.xlu0 20
  %48 = vperm.xlu0 %47, %v13
  %v49 = vpop.permute.xlu0 %48
  %51 = vset.pattern.permute.xlu0 0
  %52 = vperm.xlu0 %51, %v13
  %v53 = vpop.permute.xlu0 %52
  %v55 = vperm.slane %v30, 0
  %v56 = vmul.f32 %v53, %v55
  %v57 = vadd.f32 %v49, %v56
  %58 = vset.pattern.permute.xlu0 1
  %59 = vperm.xlu0 %58, %v13
  %v60 = vpop.permute.xlu0 %59
  %v62 = vperm.slane %v30, 1
  %v63 = vmul.f32 %v60, %v62
  %v64 = vadd.f32 %v57, %v63
  %65 = vset.pattern.permute.xlu0 2
  %66 = vperm.xlu0 %65, %v13
  %v67 = vpop.permute.xlu0 %66
  %v69 = vperm.slane %v30, 2
  %v70 = vmul.f32 %v67, %v69
  %v71 = vadd.f32 %v64, %v70
  %72 = vset.pattern.permute.xlu0 3
  %73 = vperm.xlu0 %72, %v13
  %v74 = vpop.permute.xlu0 %73
  %v76 = vperm.slane %v30, 3
  %v77 = vmul.f32 %v74, %v76
  %v78 = vadd.f32 %v71, %v77
  %v79 = vmax.f32 %v78, 0.0
  %80 = vset.pattern.permute.xlu0 21
  %81 = vperm.xlu0 %80, %v13
  %v82 = vpop.permute.xlu0 %81
  %84 = vset.pattern.permute.xlu0 4
  %85 = vperm.xlu0 %84, %v13
  %v86 = vpop.permute.xlu0 %85
  %v88 = vperm.slane %v79, 0
  %v89 = vmul.f32 %v86, %v88
  %v90 = vadd.f32 %v82, %v89
  %91 = vset.pattern.permute.xlu0 5
  %92 = vperm.xlu0 %91, %v13
  %v93 = vpop.permute.xlu0 %92
  %v95 = vperm.slane %v79, 1
  %v96 = vmul.f32 %v93, %v95
  %v97 = vadd.f32 %v90, %v96
  %98 = vset.pattern.permute.xlu0 6
  %99 = vperm.xlu0 %98, %v13
  %v100 = vpop.permute.xlu0 %99
  %v102 = vperm.slane %v79, 2
  %v103 = vmul.f32 %v100, %v102
  %v104 = vadd.f32 %v97, %v103
  %105 = vset.pattern.permute.xlu0 7
  %106 = vperm.xlu0 %105, %v13
  %v107 = vpop.permute.xlu0 %106
  %v109 = vperm.slane %v79, 3
  %v110 = vmul.f32 %v107, %v109
  %v111 = vadd.f32 %v104, %v110
  %112 = vset.pattern.permute.xlu0 8
  %113 = vperm.xlu0 %112, %v13
  %v114 = vpop.permute.xlu0 %113
  %v116 = vperm.slane %v79, 4
  %v117 = vmul.f32 %v114, %v116
  %v118 = vadd.f32 %v111, %v117
  %119 = vset.pattern.permute.xlu0 9
  %120 = vperm.xlu0 %119, %v13
  %v121 = vpop.permute.xlu0 %120
  %v123 = vperm.slane %v79, 5
  %v124 = vmul.f32 %v121, %v123
  %v125 = vadd.f32 %v118, %v124
  %126 = vset.pattern.permute.xlu0 10
  %127 = vperm.xlu0 %126, %v13
  %v128 = vpop.permute.xlu0 %127
  %v130 = vperm.slane %v79, 6
  %v131 = vmul.f32 %v128, %v130
  %v132 = vadd.f32 %v125, %v131
  %133 = vset.pattern.permute.xlu0 11
  %134 = vperm.xlu0 %133, %v13
  %v135 = vpop.permute.xlu0 %134
  %v137 = vperm.slane %v79, 7
  %v138 = vmul.f32 %v135, %v137
  %v139 = vadd.f32 %v132, %v138
  %v140 = vmax.f32 %v139, 0.0
  %141 = vset.pattern.permute.xlu0 22
  %142 = vperm.xlu0 %141, %v13
  %v143 = vpop.permute.xlu0 %142
  %145 = vset.pattern.permute.xlu0 12
  %146 = vperm.xlu0 %145, %v13
  %v147 = vpop.permute.xlu0 %146
  %v149 = vperm.slane %v140, 0
  %v150 = vmul.f32 %v147, %v149
  %v151 = vadd.f32 %v143, %v150
  %152 = vset.pattern.permute.xlu0 13
  %153 = vperm.xlu0 %152, %v13
  %v154 = vpop.permute.xlu0 %153
  %v156 = vperm.slane %v140, 1
  %v157 = vmul.f32 %v154, %v156
  %v158 = vadd.f32 %v151, %v157
  %159 = vset.pattern.permute.xlu0 14
  %160 = vperm.xlu0 %159, %v13
  %v161 = vpop.permute.xlu0 %160
  %v163 = vperm.slane %v140, 2
  %v164 = vmul.f32 %v161, %v163
  %v165 = vadd.f32 %v158, %v164
  %166 = vset.pattern.permute.xlu0 15
  %167 = vperm.xlu0 %166, %v13
  %v168 = vpop.permute.xlu0 %167
  %v170 = vperm.slane %v140, 3
  %v171 = vmul.f32 %v168, %v170
  %v172 = vadd.f32 %v165, %v171
  %173 = vset.pattern.permute.xlu0 16
  %174 = vperm.xlu0 %173, %v13
  %v175 = vpop.permute.xlu0 %174
  %v177 = vperm.slane %v140, 4
  %v178 = vmul.f32 %v175, %v177
  %v179 = vadd.f32 %v172, %v178
  %180 = vset.pattern.permute.xlu0 17
  %181 = vperm.xlu0 %180, %v13
  %v182 = vpop.permute.xlu0 %181
  %v184 = vperm.slane %v140, 5
  %v185 = vmul.f32 %v182, %v184
  %v186 = vadd.f32 %v179, %v185
  %187 = vset.pattern.permute.xlu0 18
  %188 = vperm.xlu0 %187, %v13
  %v189 = vpop.permute.xlu0 %188
  %v191 = vperm.slane %v140, 6
  %v192 = vmul.f32 %v189, %v191
  %v193 = vadd.f32 %v186, %v192
  %194 = vset.pattern.permute.xlu0 19
  %195 = vperm.xlu0 %194, %v13
  %v196 = vpop.permute.xlu0 %195
  %v198 = vperm.slane %v140, 7
  %v199 = vmul.f32 %v196, %v198
  %v200 = vadd.f32 %v193, %v199
  %201 = vxpose.xlu0.b32.start [1/16] %v200, 128
  %202 = vxpose.xlu0.b32.cont [2/16] 0.0, 128
  %203 = vxpose.xlu0.b32.cont [3/16] 0.0, 128
  %204 = vxpose.xlu0.b32.cont [4/16] 0.0, 128
  %205 = vxpose.xlu0.b32.cont [5/16] 0.0, 128
  %206 = vxpose.xlu0.b32.cont [6/16] 0.0, 128
  %207 = vxpose.xlu0.b32.cont [7/16] 0.0, 128
  %208 = vxpose.xlu0.b32.cont [8/16] 0.0, 128
  %209 = vxpose.xlu0.b32.cont [9/16] 0.0, 128
  %210 = vxpose.xlu0.b32.cont [10/16] 0.0, 128
  %211 = vxpose.xlu0.b32.cont [11/16] 0.0, 128
  %212 = vxpose.xlu0.b32.cont [12/16] 0.0, 128
  %213 = vxpose.xlu0.b32.cont [13/16] 0.0, 128
  %214 = vxpose.xlu0.b32.cont [14/16] 0.0, 128
  %215 = vxpose.xlu0.b32.cont [15/16] 0.0, 128
  %216 = vxpose.xlu0.b32.end [16/16] 0.0, 128
  %v217 = vpop.trf.xlu0
  %v218 = vpop.trf.xlu0
  %v219 = vpop.trf.xlu0
  %v220 = vpop.trf.xlu0
  %v221 = vpop.trf.xlu0
  %v222 = vpop.trf.xlu0
  %v223 = vpop.trf.xlu0
  %v224 = vpop.trf.xlu0
  %v225 = vpop.trf.xlu0
  %v226 = vpop.trf.xlu0
  %v227 = vpop.trf.xlu0
  %v228 = vpop.trf.xlu0
  %v229 = vpop.trf.xlu0
  %v230 = vpop.trf.xlu0
  %v231 = vpop.trf.xlu0
  %v232 = vpop.trf.xlu0
  %vm233 = vcmask 23552
  %234 = vst.msk [vmem:[%s2] sm:$0xff] %vm233, %v217
  %235 = vst.msk [vmem:[%s2 + $0x8] sm:$0xff] %vm233, %v218
  // Predicated region
  $region10: #{multiclass_forward.1} parent=0 // pred_check
    _
  $region11: #{multiclass_forward.1} parent=0 // pred_check_branch
    %237 = sbr.rel (0) target = $region13
  $region12: #{multiclass_forward.1} parent=0 // pred_region
    _
  $region13: #{multiclass_forward.1} parent=0 // pred_fallthru
    _
  // Predicated region
  $region14: #{multiclass_forward.1} parent=0 // pred_check
    _
  $region15: #{multiclass_forward.1} parent=0 // pred_check_branch
    %239 = sbr.rel (0) target = $region17
  $region16: #{multiclass_forward.1} parent=0 // pred_region
    _
  $region17: #{multiclass_forward.1} parent=0 // pred_fallthru
    _

</llo_original>
